<compile_context>
chip_gen: v5e
topology: v5e:2x2
jax: 0.10.0
libtpu: 0.0.40
codegen_flags: <defaults>
</compile_context>

<pallas_src>
import math
import functools

import jax
import jax.numpy as jnp
from jax import lax
from jax.experimental import pallas as pl
from jax.experimental.pallas import tpu as pltpu


_STATIC_UNROLL_MAX = 32  # static K/V-chunk unroll bound (VMEM sizing keeps it small)


# ---------------------------------------------------------------------------
# Kernel body
# ---------------------------------------------------------------------------

def _attention_body(qkv_ref, ekv_ref, o_ref, acc_ref, m_ref, l_ref, *,
                    ch, kv_tile, scale, matmul_dtype):
    """One (batch*head) tile of QKV attention with an online (flash) softmax.

    qkv_ref : [bh, 3*ch, T]    packed q/k/v   (one DMA per grid step)
    ekv_ref : [bh, 2*ch, S_e]  packed encoder k/v, or None
    o_ref   : [bh, ch, T]      output
    acc_ref : [bh, ch, T] f32  un-normalized PV accumulator (output layout)
    m_ref   : [bh, 1,  T] f32  running max of the scores per query position
    l_ref   : [bh, 1,  T] f32  running sum of exp(scores - m)
    """
    t = o_ref.shape[-1]

    # q with both softmax scale factors folded in once: (q*s).(k*s) == (q*s^2).k
    qs = qkv_ref[:, 0:ch, :] * (scale * scale)
    if matmul_dtype is not None:
        qs = qs.astype(matmul_dtype)

    m_ref[...] = jnp.full(m_ref.shape, -jnp.inf, m_ref.dtype)
    l_ref[...] = jnp.zeros(l_ref.shape, l_ref.dtype)
    acc_ref[...] = jnp.zeros(acc_ref.shape, acc_ref.dtype)

    # scores[b,s,t] = sum_c k[b,c,s] * q[b,c,t]   (A^T.B: contracts sublane dims)
    dn_qk = (((1,), (1,)), ((0,), (0,)))
    # acc[b,c,t]   += sum_s v[b,c,s] * p[b,s,t]   (A.B : lhs lane x rhs sublane)
    dn_pv = (((2,), (1,)), ((0,), (0,)))

    def update(k_blk, v_blk):
        if matmul_dtype is not None:
            k_blk = k_blk.astype(matmul_dtype)
            v_blk = v_blk.astype(matmul_dtype)
        w = lax.dot_general(k_blk, qs, dn_qk,
                            preferred_element_type=jnp.float32)      # [bh, S_blk, T]
        m_prev = m_ref[...]
        m_new = jnp.maximum(m_prev, jnp.max(w, axis=1, keepdims=True))
        alpha = jnp.exp(m_prev - m_new)
        p = jnp.exp(w - m_new)                                        # un-normalized
        l_ref[...] = alpha * l_ref[...] + jnp.sum(p, axis=1, keepdims=True)
        acc_ref[...] = alpha * acc_ref[...] + lax.dot_general(
            v_blk, p.astype(v_blk.dtype), dn_pv,
            preferred_element_type=jnp.float32)
        m_ref[...] = m_new

    # Encoder segment first (matches torch.cat([ek, k], dim=-1)).  The shared
    # online max/denominator makes this exactly the softmax over the
    # concatenated key axis.
    if ekv_ref is not None:
        update(ekv_ref[:, 0:ch, :], ekv_ref[:, ch:2 * ch, :])

    def self_chunk(start, size):
        update(qkv_ref[:, ch:2 * ch, pl.ds(start, size)],
               qkv_ref[:, 2 * ch:3 * ch, pl.ds(start, size)])

    n_full = t // kv_tile
    rem = t % kv_tile
    if n_full > 0:
        if n_full <= _STATIC_UNROLL_MAX:
            for j in range(n_full):                 # static starts -> aligned loads
                self_chunk(j * kv_tile, kv_tile)
        else:
            # TODO(synk): dynamic lane-dim slicing; only reachable for very long
            # sequences (the VMEM sizing below keeps n_full <= 32 in practice).
            @pl.loop(0, n_full)
            def _(j):
                start = j * kv_tile
                if kv_tile % 128 == 0:
                    start = pl.multiple_of(start, 128)
                self_chunk(start, kv_tile)
    if rem > 0:
        self_chunk(n_full * kv_tile, rem)           # static remainder chunk

    # Normalize once after the PV matmuls: O(C*T) multiplies instead of
    # O(T*(T+S)); the reciprocal goes to the EUP slot.
    inv_l = pl.reciprocal(l_ref[...], approx=True)
    o_ref[...] = (acc_ref[...] * inv_l).astype(o_ref.dtype)


def _self_attn_kernel(qkv_ref, o_ref, acc_ref, m_ref, l_ref, **kw):
    _attention_body(qkv_ref, None, o_ref, acc_ref, m_ref, l_ref, **kw)


def _cross_attn_kernel(qkv_ref, ekv_ref, o_ref, acc_ref, m_ref, l_ref, **kw):
    _attention_body(qkv_ref, ekv_ref, o_ref, acc_ref, m_ref, l_ref, **kw)


# ---------------------------------------------------------------------------
# Sizing helpers (generation-aware VMEM budgets + tile selection)
# ---------------------------------------------------------------------------

def _vmem_capacity_bytes():
    try:
        info = pltpu.get_tpu_info()
        for attr in ("vmem_capacity_bytes", "vmem_size_bytes", "vmem_bytes"):
            cap = getattr(info, attr, None)
            if cap:
                return int(cap)
    except Exception:
        pass
    return 64 * 1024 * 1024          # conservative (v7x-sized) fallback


def _choose_tiles(b, ch, t, s_enc, in_itemsize, mm_itemsize, budget_bytes,
                  kv_tile_max):
    """Pick (bh_tile, kv_tile) so one grid step's working set fits the budget."""
    sub = lambda n: ((max(n, 1) + 7) // 8) * 8
    lane = lambda n: ((max(n, 1) + 127) // 128) * 128

    def step_bytes(bh, kt):
        chunk = max(kt, s_enc) if s_enc else kt
        # Double-buffered pipeline blocks: packed qkv, packed encoder kv, output.
        io = 2 * bh * in_itemsize * (3 * ch * t + 2 * ch * s_enc + ch * t)
        # f32 scratch: acc [bh, ch, T] + m, l [bh, 1, T].
        scratch = 4 * bh * (sub(ch) + 2 * sub(1)) * lane(t)
        # Per-chunk f32 score/prob temporaries [bh, chunk, T] (w and p).
        logits = 2 * 4 * bh * sub(chunk) * lane(t)
        # matmul-dtype copies: p for the PV matmul, scaled q, k/v chunk casts.
        casts = bh * mm_itemsize * (sub(chunk) * lane(t) + sub(ch) * lane(t)
                                    + 2 * sub(ch) * lane(chunk))
        # Scaled q in f32 before the cast + headroom for small temporaries.
        extra = 4 * bh * sub(ch) * lane(t)
        return io + scratch + logits + casts + extra

    kt = t if t <= kv_tile_max else kv_tile_max
    while step_bytes(1, kt) > budget_bytes and kt > 128:
        kt = max(128, kt // 2)
    if step_bytes(1, kt) > budget_bytes:
        # TODO(synk): also block the query (T) axis (full flash tiling) so that
        # arbitrarily long sequences fit; for now fail loudly instead of spilling.
        raise ValueError(
            f"QKV attention: smallest tile (bh=1, kv_tile={kt}) needs "
            f"{step_bytes(1, kt)} bytes of VMEM, budget is {budget_bytes}; "
            f"sequence length {t} requires query-axis blocking.")

    bh_cap = b if b < 2 else (b + 1) // 2   # >= 2 grid steps so both v7x cores work
    bh_tile = 1
    for cand in range(min(bh_cap, 1024), 0, -1):
        if step_bytes(cand, kt) <= budget_bytes:
            bh_tile = cand
            break
    # Prefer an exact divisor of b close to the best size (avoids a padded last
    # block); otherwise keep the best size — rows are independent and Pallas
    # drops out-of-range writes of the partial last block.
    best = bh_tile
    for cand in range(best, max(1, (3 * best) // 4) - 1, -1):
        if b % cand == 0:
            bh_tile = cand
            break
    return bh_tile, kt


# ---------------------------------------------------------------------------
# Wrapper
# ---------------------------------------------------------------------------

def qkv_attention(qkv, n_heads, encoder_kv=None, matmul_dtype="auto", kv_tile=512):
    """JAX/Pallas equivalent of QKVAttention.forward.

    qkv:          [N, H*3*C, T]
    encoder_kv:   optional [N, H*2*C, S_enc]
    matmul_dtype: "auto" (default) -> bf16 MXU operands for f32 inputs (f32
                  accumulation + f32 softmax); None -> exact all-f32 matmuls.
    kv_tile:      upper bound on the in-kernel K/V chunk length.
    returns:      [N, H*C, T]
    """
    bs, width, length = qkv.shape
    assert width % (3 * n_heads) == 0
    ch = width // (3 * n_heads)
    b = bs * n_heads
    dtype = qkv.dtype

    if matmul_dtype == "auto":
        matmul_dtype = jnp.bfloat16 if dtype == jnp.float32 else None

    qkv_r = qkv.reshape(b, 3 * ch, length)        # contiguous -> free reshape
    s_enc = 0
    ekv_r = None
    if encoder_kv is not None:
        assert encoder_kv.shape[1] == n_heads * ch * 2
        ekv_r = encoder_kv.reshape(b, 2 * ch, encoder_kv.shape[-1])
        s_enc = ekv_r.shape[-1]

    scale = 1.0 / math.sqrt(math.sqrt(ch))
    in_itemsize = jnp.dtype(dtype).itemsize
    mm_itemsize = (jnp.dtype(matmul_dtype).itemsize
                   if matmul_dtype is not None else in_itemsize)

    # Generation-aware VMEM sizing: 128-MiB parts (v5e/v6e) vs 64-MiB (v7x).
    vmem_cap = _vmem_capacity_bytes()
    if vmem_cap >= 100 * 1024 * 1024:
        vmem_limit, budget = 96 * 1024 * 1024, 44 * 1024 * 1024
    else:
        vmem_limit, budget = 40 * 1024 * 1024, 18 * 1024 * 1024

    bh_tile, kv_tile = _choose_tiles(b, ch, length, s_enc, in_itemsize,
                                     mm_itemsize, budget, kv_tile_max=kv_tile)
    grid = (pl.cdiv(b, bh_tile),)

    # TODO(synk): for non-8-aligned ch with sub-32-bit dtypes the in-kernel
    # sub-views of the packed buffer are sublane-misaligned (correct but slower).
    kernel_kw = dict(ch=ch, kv_tile=kv_tile, scale=scale, matmul_dtype=matmul_dtype)
    in_specs = [pl.BlockSpec((bh_tile, 3 * ch, length), lambda i: (i, 0, 0))]
    args = (qkv_r,)
    if encoder_kv is not None:
        in_specs.append(pl.BlockSpec((bh_tile, 2 * ch, s_enc), lambda i: (i, 0, 0)))
        args = (qkv_r, ekv_r)
        kernel = functools.partial(_cross_attn_kernel, **kernel_kw)
    else:
        kernel = functools.partial(_self_attn_kernel, **kernel_kw)

    out = pl.pallas_call(
        kernel,
        out_shape=jax.ShapeDtypeStruct((b, ch, length), dtype),
        grid_spec=pltpu.PrefetchScalarGridSpec(
            num_scalar_prefetch=0,
            grid=grid,
            in_specs=in_specs,
            out_specs=pl.BlockSpec((bh_tile, ch, length), lambda i: (i, 0, 0)),
            scratch_shapes=[
                pltpu.VMEM((bh_tile, ch, length), jnp.float32),   # acc
                pltpu.VMEM((bh_tile, 1, length), jnp.float32),    # running max
                pltpu.VMEM((bh_tile, 1, length), jnp.float32),    # running denom
            ],
        ),
        compiler_params=pltpu.CompilerParams(
            dimension_semantics=("parallel",),
            vmem_limit_bytes=vmem_limit,
        ),
    )(*args)

    return out.reshape(bs, n_heads * ch, length)


# ---------------------------------------------------------------------------
# Pure-JAX reference mirroring the PyTorch forward exactly
# ---------------------------------------------------------------------------

def _reference(qkv, n_heads, encoder_kv=None):
    bs, width, length = qkv.shape
    ch = width // (3 * n_heads)
    b = bs * n_heads
    qkv_r = qkv.reshape(b, 3 * ch, length)
    q, k, v = qkv_r[:, :ch], qkv_r[:, ch:2 * ch], qkv_r[:, 2 * ch:]
    if encoder_kv is not None:
        ekv = encoder_kv.reshape(b, 2 * ch, -1)
        k = jnp.concatenate([ekv[:, :ch], k], axis=-1)
        v = jnp.concatenate([ekv[:, ch:], v], axis=-1)
    scale = 1.0 / math.sqrt(math.sqrt(ch))
    w = jnp.einsum('bct,bcs->bts', q * scale, k * scale)
    w = jax.nn.softmax(w.astype(jnp.float32), axis=-1).astype(w.dtype)
    a = jnp.einsum('bts,bcs->bct', w, v)
    return a.reshape(bs, -1, length)


if __name__ == "__main__":
    key = jax.random.PRNGKey(0)
    k1, k2, k3, k4 = jax.random.split(key, 4)

    # --- Small shapes, exact (f32 MXU) path: single K/V chunk, static slices.
    N, H, C, T, S_ENC = 2, 2, 8, 16, 8
    qkv = jax.random.normal(k1, (N, H * 3 * C, T), dtype=jnp.float32)
    ekv = jax.random.normal(k2, (N, H * 2 * C, S_ENC), dtype=jnp.float32)

    out = qkv_attention(qkv, H, matmul_dtype=None)
    jax.block_until_ready(out)
    ref = _reference(qkv, H)
    assert out.shape == (N, H * C, T)
    assert jnp.allclose(out, ref, atol=2e-3, rtol=2e-3), "self-attn (f32) mismatch"

    out_x = qkv_attention(qkv, H, encoder_kv=ekv, matmul_dtype=None)
    jax.block_until_ready(out_x)
    ref_x = _reference(qkv, H, encoder_kv=ekv)
    assert out_x.shape == (N, H * C, T)
    assert jnp.allclose(out_x, ref_x, atol=2e-3, rtol=2e-3), "cross-attn (f32) mismatch"

    # --- Longer sequence, default (bf16 MXU) path: exercises the K/V chunk
    #     loop (5 full chunks + a static remainder chunk) and the encoder path.
    N2, H2, C2, T2, S2 = 2, 2, 8, 672, 8
    qkv2 = jax.random.normal(k3, (N2, H2 * 3 * C2, T2), dtype=jnp.float32)
    ekv2 = jax.random.normal(k4, (N2, H2 * 2 * C2, S2), dtype=jnp.float32)

    out2 = qkv_attention(qkv2, H2, encoder_kv=ekv2, kv_tile=128)
    jax.block_until_ready(out2)
    ref2 = _reference(qkv2, H2, encoder_kv=ekv2)
    assert out2.shape == (N2, H2 * C2, T2)
    assert jnp.allclose(out2, ref2, atol=5e-2, rtol=5e-2), "bf16 chunked path mismatch"

    print("KERNEL_OK")
</pallas_src>

<mosaic_0001>
module attributes {stable_mosaic.version = 11 : i64} {
  func.func @_self_attn_kernel(%arg0: i32, %arg1: memref<2x24x16xf32, #tpu.memory_space<vmem>>, %arg2: memref<2x8x16xf32, #tpu.memory_space<vmem>>, %arg3: memref<2x8x16xf32, #tpu.memory_space<vmem>>, %arg4: memref<2x1x16xf32, #tpu.memory_space<vmem>>, %arg5: memref<2x1x16xf32, #tpu.memory_space<vmem>>) attributes {dimension_semantics = [#tpu.dimension_semantics<parallel>], iteration_bounds = array<i64: 2>, scalar_prefetch = 0 : i64, scratch_operands = 3 : i64, tpu.core_type = #tpu.core_type<tc>, window_params = [{transform_indices = @transform_0, window_bounds = array<i64: 2, 24, 16>}, {transform_indices = @transform_1, window_bounds = array<i64: 2, 8, 16>}]} {
    %c0 = arith.constant 0 : index
    %c0_0 = arith.constant 0 : index
    %c0_1 = arith.constant 0 : index
    %0 = vector.load %arg1[%c0, %c0_0, %c0_1] : memref<2x24x16xf32, #tpu.memory_space<vmem>>, vector<2x8x16xf32>
    %cst = arith.constant 0.353553385 : f32
    %1 = vector.broadcast %cst : f32 to vector<2x8x16xf32>
    %2 = arith.mulf %0, %1 : vector<2x8x16xf32>
    %cst_2 = arith.constant 0xFF800000 : f32
    %3 = vector.broadcast %cst_2 : f32 to vector<2x1x16xf32>
    %c0_3 = arith.constant 0 : index
    %c0_4 = arith.constant 0 : index
    %c0_5 = arith.constant 0 : index
    %4 = vector.load %arg4[%c0_3, %c0_4, %c0_5] : memref<2x1x16xf32, #tpu.memory_space<vmem>>, vector<2x1x16xf32>
    tpu.vector_store %arg4[%c0_3, %c0_4, %c0_5], %3 {strides = array<i32>} : memref<2x1x16xf32, #tpu.memory_space<vmem>>, vector<2x1x16xf32>,
    %cst_6 = arith.constant 0.000000e+00 : f32
    %5 = vector.broadcast %cst_6 : f32 to vector<2x1x16xf32>
    %c0_7 = arith.constant 0 : index
    %c0_8 = arith.constant 0 : index
    %c0_9 = arith.constant 0 : index
    %6 = vector.load %arg5[%c0_7, %c0_8, %c0_9] : memref<2x1x16xf32, #tpu.memory_space<vmem>>, vector<2x1x16xf32>
    tpu.vector_store %arg5[%c0_7, %c0_8, %c0_9], %5 {strides = array<i32>} : memref<2x1x16xf32, #tpu.memory_space<vmem>>, vector<2x1x16xf32>,
    %cst_10 = arith.constant 0.000000e+00 : f32
    %7 = vector.broadcast %cst_10 : f32 to vector<2x8x16xf32>
    %c0_11 = arith.constant 0 : index
    %c0_12 = arith.constant 0 : index
    %c0_13 = arith.constant 0 : index
    %8 = vector.load %arg3[%c0_11, %c0_12, %c0_13] : memref<2x8x16xf32, #tpu.memory_space<vmem>>, vector<2x8x16xf32>
    tpu.vector_store %arg3[%c0_11, %c0_12, %c0_13], %7 {strides = array<i32>} : memref<2x8x16xf32, #tpu.memory_space<vmem>>, vector<2x8x16xf32>,
    %c0_14 = arith.constant 0 : index
    %c8 = arith.constant 8 : index
    %c0_15 = arith.constant 0 : index
    %9 = vector.load %arg1[%c0_14, %c8, %c0_15] : memref<2x24x16xf32, #tpu.memory_space<vmem>>, vector<2x8x16xf32>
    %c0_16 = arith.constant 0 : index
    %c16 = arith.constant 16 : index
    %c0_17 = arith.constant 0 : index
    %10 = vector.load %arg1[%c0_16, %c16, %c0_17] : memref<2x24x16xf32, #tpu.memory_space<vmem>>, vector<2x8x16xf32>
    %cst_18 = arith.constant dense<0.000000e+00> : vector<2x16x16xf32>
    %11 = tpu.matmul %9, %2, %cst_18 {dimension_numbers = #tpu.dot_dimension_numbers<[1], [1], [2], [2], [0, 0, 0, 2, 1, 2], [0], [0]>} : vector<2x8x16xf32>, vector<2x8x16xf32>, vector<2x16x16xf32> -> vector<2x16x16xf32>
    %c0_19 = arith.constant 0 : index
    %c0_20 = arith.constant 0 : index
    %c0_21 = arith.constant 0 : index
    %12 = vector.load %arg4[%c0_19, %c0_20, %c0_21] : memref<2x1x16xf32, #tpu.memory_space<vmem>>, vector<2x1x16xf32>
    %cst_22 = arith.constant dense<0xFF800000> : vector<2x16xf32>
    %13 = vector.multi_reduction <maximumf>, %11, %cst_22 [1] : vector<2x16x16xf32> to vector<2x16xf32>
    %14 = vector.shape_cast %13 : vector<2x16xf32> to vector<2x1x16xf32>
    %15 = arith.maximumf %12, %14 : vector<2x1x16xf32>
    %16 = arith.subf %12, %15 : vector<2x1x16xf32>
    %17 = math.exp %16 : vector<2x1x16xf32>
    %18 = vector.broadcast %15 : vector<2x1x16xf32> to vector<2x16x16xf32>
    %19 = arith.subf %11, %18 : vector<2x16x16xf32>
    %20 = math.exp %19 : vector<2x16x16xf32>
    %c0_23 = arith.constant 0 : index
    %c0_24 = arith.constant 0 : index
    %c0_25 = arith.constant 0 : index
    %21 = vector.load %arg5[%c0_23, %c0_24, %c0_25] : memref<2x1x16xf32, #tpu.memory_space<vmem>>, vector<2x1x16xf32>
    %22 = arith.mulf %17, %21 : vector<2x1x16xf32>
    %cst_26 = arith.constant dense<0.000000e+00> : vector<2x16xf32>
    %23 = vector.multi_reduction <add>, %20, %cst_26 [1] : vector<2x16x16xf32> to vector<2x16xf32>
    %24 = vector.shape_cast %23 : vector<2x16xf32> to vector<2x1x16xf32>
    %25 = arith.addf %22, %24 : vector<2x1x16xf32>
    %c0_27 = arith.constant 0 : index
    %c0_28 = arith.constant 0 : index
    %c0_29 = arith.constant 0 : index
    %26 = vector.load %arg5[%c0_27, %c0_28, %c0_29] : memref<2x1x16xf32, #tpu.memory_space<vmem>>, vector<2x1x16xf32>
    tpu.vector_store %arg5[%c0_27, %c0_28, %c0_29], %25 {strides = array<i32>} : memref<2x1x16xf32, #tpu.memory_space<vmem>>, vector<2x1x16xf32>,
    %c0_30 = arith.constant 0 : index
    %c0_31 = arith.constant 0 : index
    %c0_32 = arith.constant 0 : index
    %27 = vector.load %arg3[%c0_30, %c0_31, %c0_32] : memref<2x8x16xf32, #tpu.memory_space<vmem>>, vector<2x8x16xf32>
    %28 = vector.broadcast %17 : vector<2x1x16xf32> to vector<2x8x16xf32>
    %29 = arith.mulf %28, %27 : vector<2x8x16xf32>
    %cst_33 = arith.constant dense<0.000000e+00> : vector<2x8x16xf32>
    %30 = tpu.matmul %10, %20, %cst_33 {dimension_numbers = #tpu.dot_dimension_numbers<[2], [1], [1], [2], [0, 0, 0, 1, 1, 2], [0], [0]>} : vector<2x8x16xf32>, vector<2x16x16xf32>, vector<2x8x16xf32> -> vector<2x8x16xf32>
    %31 = arith.addf %29, %30 : vector<2x8x16xf32>
    %c0_34 = arith.constant 0 : index
    %c0_35 = arith.constant 0 : index
    %c0_36 = arith.constant 0 : index
    %32 = vector.load %arg3[%c0_34, %c0_35, %c0_36] : memref<2x8x16xf32, #tpu.memory_space<vmem>>, vector<2x8x16xf32>
    tpu.vector_store %arg3[%c0_34, %c0_35, %c0_36], %31 {strides = array<i32>} : memref<2x8x16xf32, #tpu.memory_space<vmem>>, vector<2x8x16xf32>,
    %c0_37 = arith.constant 0 : index
    %c0_38 = arith.constant 0 : index
    %c0_39 = arith.constant 0 : index
    %33 = vector.load %arg4[%c0_37, %c0_38, %c0_39] : memref<2x1x16xf32, #tpu.memory_space<vmem>>, vector<2x1x16xf32>
    tpu.vector_store %arg4[%c0_37, %c0_38, %c0_39], %15 {strides = array<i32>} : memref<2x1x16xf32, #tpu.memory_space<vmem>>, vector<2x1x16xf32>,
    %c0_40 = arith.constant 0 : index
    %c0_41 = arith.constant 0 : index
    %c0_42 = arith.constant 0 : index
    %34 = vector.load %arg5[%c0_40, %c0_41, %c0_42] : memref<2x1x16xf32, #tpu.memory_space<vmem>>, vector<2x1x16xf32>
    %35 = tpu.reciprocal %34 {approx = true} : vector<2x1x16xf32> -> vector<2x1x16xf32>
    %c0_43 = arith.constant 0 : index
    %c0_44 = arith.constant 0 : index
    %c0_45 = arith.constant 0 : index
    %36 = vector.load %arg3[%c0_43, %c0_44, %c0_45] : memref<2x8x16xf32, #tpu.memory_space<vmem>>, vector<2x8x16xf32>
    %37 = vector.broadcast %35 : vector<2x1x16xf32> to vector<2x8x16xf32>
    %38 = arith.mulf %36, %37 : vector<2x8x16xf32>
    %c0_46 = arith.constant 0 : index
    %c0_47 = arith.constant 0 : index
    %c0_48 = arith.constant 0 : index
    %39 = vector.load %arg2[%c0_46, %c0_47, %c0_48] : memref<2x8x16xf32, #tpu.memory_space<vmem>>, vector<2x8x16xf32>
    tpu.vector_store %arg2[%c0_46, %c0_47, %c0_48], %38 {strides = array<i32>} : memref<2x8x16xf32, #tpu.memory_space<vmem>>, vector<2x8x16xf32>,
    return
  }
  func.func @transform_0(%arg0: i32) -> (i32, i32, i32) {
    %c0_i32 = arith.constant 0 : i32
    %c0_i32_0 = arith.constant 0 : i32
    %c0_i32_1 = arith.constant 0 : i32
    return %arg0, %c0_i32, %c0_i32_0 : i32, i32, i32
  }
  func.func @transform_1(%arg0: i32) -> (i32, i32, i32) {
    %c0_i32 = arith.constant 0 : i32
    %c0_i32_0 = arith.constant 0 : i32
    %c0_i32_1 = arith.constant 0 : i32
    return %arg0, %c0_i32, %c0_i32_0 : i32, i32, i32
  }
}

</mosaic_0001>

<llo_original>
// kernel: tpu_custom_call.1
$region0: #{tpu_custom_call.1}
  #allocation0 [shape = 'u32[]', space=smem, size = 0x4, offset = 0x4, fixed_abs, tag = 'smem constant byte address 0x4 - core index']
  #allocation1 [shape = 'u32[72,128]{1,0:T(1,128)}', space=vmem, size = 0x9000, scoped, tag = 'internal scratch']
  #allocation2 [shape = 'f32[2,8,16]{2,1,0:T(8,128)}', space=vmem, size = 0x2000, scoped, tag = 'scratch operand']
  #allocation3 [shape = 'f32[2,1,16]{2,1,0:T(1,128)}', space=vmem, size = 0x400, scoped, tag = 'scratch operand']
  #allocation4 [shape = 'f32[2,1,16]{2,1,0:T(1,128)}', space=vmem, size = 0x400, scoped, tag = 'scratch operand']
  %s0 = inlined_call_operand.vmem [shape: f32[4,24,16], index: 0, kind: input, shape index: {}]
  %s1 = inlined_call_operand.hbm [shape: f32[4,8,16], index: 1, kind: output, shape index: {}]
  %s2 = sld [smem:[#allocation0]]
  $region37: #{tpu_custom_call.1} parent=0
    _
  %s4 = ssub.s32 1, %s2
  %s5 = scalar_select 0, %s4, %s2
  $region1: #{tpu_custom_call.1} parent=0
    #allocation5 [shape = 'u8[16384]{0}', space=vmem, size = 0x4000, scoped, tag = 'output window, operand 0']
    #allocation6 [shape = 's32[2]{0}', space=sflag, size = 0x8, scoped, tag = 'scoped memory for tpu_custom_call.1']
    %6 = vsyncpa [#allocation6], 0
    %s7 = scalar_lea.sflag [#allocation6], 1
    %8 = vsyncpa %s7, 0
    loop: start=0, step=1, limit=4
    $region2: #{tpu_custom_call.1} parent=1 // loop_pre_header
      _
    $region3: #{tpu_custom_call.1} parent=1 // loop_header
      %s10 = sphi 0, %s14
      %p11 = scmp.ge.s32.totalorder %s10, 4
      %s20 = sphi 0, %s22
      %s23 = sphi 0, %s20
      %s24 = sphi 0, %s23
      %s40 = sphi 0, %s24
      %s46 = sphi 0, %s48
      %s49 = sphi 0, %s46
      %s50 = sphi 0, %s49
      %s66 = sphi 0, %s50
    $region4: #{tpu_custom_call.1} parent=1 // loop_header_branch
      %13 = sbr.rel (%p11) target = $region8
    $region5: #{tpu_custom_call.1} parent=1 // loop_body
      %s15 = ssub.s32 %s10, 1
      %s16 = ssub.s32 %s10, 2
      %s17 = sadd.s32 %s10, 1
      %s18 = ssub.s32 %s10, %s17
      %p19 = scmp.eq.s32.totalorder %s18, 0
      %s21 = sadd.s32 %s20, 1
      %s22 = scalar_select %p19, %s20, %s21
      %p25 = pneg %p19
      %p26 = scmp.eq.s32.totalorder %s10, 1
      %p27 = por %p25, %p26
      %p28 = scmp.ne.s32.totalorder %s20, %s23
      %p29 = scmp.eq.s32.totalorder %s10, 0
      %p30 = por %p28, %p29
      %p31 = scmp.ne.s32.totalorder %s20, %s23
      %p32 = scmp.eq.s32.totalorder %s15, 1
      %p33 = por %p31, %p32
      %p34 = scmp.ne.s32.totalorder %s23, %s24
      %p35 = scmp.eq.s32.totalorder %s15, 0
      %p36 = por %p34, %p35
      %p37 = scmp.ne.s32.totalorder %s23, %s24
      %p38 = scmp.eq.s32.totalorder %s16, 1
      %p39 = por %p37, %p38
      %p41 = scmp.ne.s32.totalorder %s24, %s40
      %p42 = scmp.eq.s32.totalorder %s16, 0
      %p43 = por %p41, %p42
      %s44 = ssub.s32 %s10, %s17
      %p45 = scmp.eq.s32.totalorder %s44, 0
      %s47 = sadd.s32 %s46, 1
      %s48 = scalar_select %p45, %s46, %s47
      %p51 = pneg %p45
      %p52 = scmp.eq.s32.totalorder %s10, 1
      %p53 = por %p51, %p52
      %p54 = scmp.ne.s32.totalorder %s46, %s49
      %p55 = scmp.eq.s32.totalorder %s10, 0
      %p56 = por %p54, %p55
      %p57 = scmp.ne.s32.totalorder %s46, %s49
      %p58 = scmp.eq.s32.totalorder %s15, 1
      %p59 = por %p57, %p58
      %p60 = scmp.ne.s32.totalorder %s49, %s50
      %p61 = scmp.eq.s32.totalorder %s15, 0
      %p62 = por %p60, %p61
      %p63 = scmp.ne.s32.totalorder %s49, %s50
      %p64 = scmp.eq.s32.totalorder %s16, 1
      %p65 = por %p63, %p64
      %p67 = scmp.ne.s32.totalorder %s50, %s66
      %p68 = scmp.eq.s32.totalorder %s16, 0
      %p69 = por %p67, %p68
      %p70 = scmp.le.s32.totalorder 1, %s10
      %p71 = scmp.lt.s32.totalorder %s10, 3
      %p72 = pnand %p70, %p71
      %p73 = pneg %p72
      // Predicated region
      $region9: #{tpu_custom_call.1} parent=5 // pred_check
        _
      $region10: #{tpu_custom_call.1} parent=5 // pred_check_branch
        %75 = sbr.rel (%p72) target = $region12
      $region11: #{tpu_custom_call.1} parent=5 // pred_region
        %s76 = ssub.s32 %s10, 1
      $region12: #{tpu_custom_call.1} parent=5 // pred_fallthru
        _
      %p77 = scmp.lt.s32.totalorder %s10, 2
      // Predicated region
      $region13: #{tpu_custom_call.1} parent=5 // pred_check
        %p78 = pneg %p77
      $region14: #{tpu_custom_call.1} parent=5 // pred_check_branch
        %80 = sbr.rel (%p78) target = $region16
      $region15: #{tpu_custom_call.1} parent=5 // pred_region
        // Predicated region
        $region17: #{tpu_custom_call.1} parent=15 // pred_check
          %p81 = pneg %p30
        $region18: #{tpu_custom_call.1} parent=15 // pred_check_branch
          %83 = sbr.rel (%p81) target = $region20
        $region19: #{tpu_custom_call.1} parent=15 // pred_region
          %s84 = smul.u32 2, %s10
          %p85 = scmp.lt.s32.totalorder %s84, 3
          %s86 = scalar_select %p85, %s84, 3
          %s87 = smul.addr %s86, 3
          %s88 = smul.addr %s87, 8
          %s89 = scalar_lea.vmem %s0, %s88
          %s90 = smul.u32 2, %s10
        $region20: #{tpu_custom_call.1} parent=15 // pred_fallthru
          _
      $region16: #{tpu_custom_call.1} parent=5 // pred_fallthru
        _
      %p91 = scmp.le.s32.totalorder 1, %s10
      %p92 = scmp.lt.s32.totalorder %s10, 3
      %p93 = pnand %p91, %p92
      %p94 = pneg %p93
      // Predicated region
      $region21: #{tpu_custom_call.1} parent=5 // pred_check
        _
      $region22: #{tpu_custom_call.1} parent=5 // pred_check_branch
        %96 = sbr.rel (%p93) target = $region24
      $region23: #{tpu_custom_call.1} parent=5 // pred_region
        %s97 = ssub.s32 %s10, 1
        %s98 = smul.u32 2, %s15
        %p99 = scmp.lt.s32.totalorder %s98, 3
        %s100 = scalar_select %p99, %s98, 3
        %s101 = smul.addr %s100, 3
        %s102 = smul.addr %s101, 8
        %s103 = scalar_lea.vmem %s0, %s102
        %p104 = pneg %p36
        %p105 = pneg %p33
        %p106 = pneg %p62
        %p107 = pneg %p59
        %s108 = sand.u32 %s49, 1
        %s109 = scalar_lea.sflag [#allocation6], %s108
        %s110 = sand.u32 %s49, 1
        %s111 = smul.addr %s110, 16
        %s112 = scalar_lea.vmem [#allocation5], %s111
        %s113 = smul.u32 2, %s15
        %p114 = scmp.lt.s32.totalorder %s113, 3
        %s115 = scalar_select %p114, %s113, 3
        %s116 = smul.addr %s115, 3
        %s117 = smul.addr %s116, 8
        %s118 = scalar_lea.vmem %s0, %s117
        %s119 = smul.u32 2, %s15
        %s120 = smul.u32 2, %s15
        %v121 = vld [vmem:[%s118] sm:$0xff]
        %v122 = vld [vmem:[%s118 + $0x18] sm:$0xff]
        %v123 = vmul.f32 %v121, 0.35355338
        %v124 = vmul.f32 %v122, 0.35355338
        %vm125 = vcmask 122880
        %126 = vst.msk [vmem:[#allocation3] sm:$0x1] %vm125, -inf
        %127 = vst.msk [vmem:[#allocation3 + $0x1] sm:$0x1] %vm125, -inf
        %128 = vst.msk [vmem:[#allocation4] sm:$0x1] %vm125, 0.0
        %129 = vst.msk [vmem:[#allocation4 + $0x1] sm:$0x1] %vm125, 0.0
        %vm130 = vcmask 130048
        %131 = vst.msk [vmem:[#allocation2] sm:$0xff] %vm130, 0.0
        %132 = vst.msk [vmem:[#allocation2 + $0x8] sm:$0xff] %vm130, 0.0
        %v133 = vld [vmem:[%s118 + $0x8] sm:$0xff]
        %v134 = vld [vmem:[%s118 + $0x20] sm:$0xff]
        %v135 = vld [vmem:[%s118 + $0x10] sm:$0xff]
        %v136 = vld [vmem:[%s118 + $0x28] sm:$0xff]
        %137 = vxpose.xlu0.b32.start [1/16] %v133, 128
        %138 = vxpose.xlu0.b32.cont [2/16] 0.0, 128
        %139 = vxpose.xlu0.b32.cont [3/16] 0.0, 128
        %140 = vxpose.xlu0.b32.cont [4/16] 0.0, 128
        %141 = vxpose.xlu0.b32.cont [5/16] 0.0, 128
        %142 = vxpose.xlu0.b32.cont [6/16] 0.0, 128
        %143 = vxpose.xlu0.b32.cont [7/16] 0.0, 128
        %144 = vxpose.xlu0.b32.cont [8/16] 0.0, 128
        %145 = vxpose.xlu0.b32.cont [9/16] 0.0, 128
        %146 = vxpose.xlu0.b32.cont [10/16] 0.0, 128
        %147 = vxpose.xlu0.b32.cont [11/16] 0.0, 128
        %148 = vxpose.xlu0.b32.cont [12/16] 0.0, 128
        %149 = vxpose.xlu0.b32.cont [13/16] 0.0, 128
        %150 = vxpose.xlu0.b32.cont [14/16] 0.0, 128
        %151 = vxpose.xlu0.b32.cont [15/16] 0.0, 128
        %152 = vxpose.xlu0.b32.end [16/16] 0.0, 128
        %v153 = vpop.trf.xlu0
        %v154 = vpop.trf.xlu0
        %v155 = vpop.trf.xlu0
        %v156 = vpop.trf.xlu0
        %v157 = vpop.trf.xlu0
        %v158 = vpop.trf.xlu0
        %v159 = vpop.trf.xlu0
        %v160 = vpop.trf.xlu0
        %v161 = vpop.trf.xlu0
        %v162 = vpop.trf.xlu0
        %v163 = vpop.trf.xlu0
        %v164 = vpop.trf.xlu0
        %v165 = vpop.trf.xlu0
        %v166 = vpop.trf.xlu0
        %v167 = vpop.trf.xlu0
        %v168 = vpop.trf.xlu0
        %vm169 = vcmask 64512
        %v171 = vsel %vm169, %v153, 0
        %v174 = vsel %vm169, %v154, 0
        %176 = vmatpush.msra.mxu0 0.0
        %177 = vmatpush.msra.mxu0 0.0
        %178 = vmatpush.msra.mxu0 0.0
        %179 = vmatpush.msra.mxu0 0.0
        %180 = vmatpush.msra.mxu0 0.0
        %181 = vmatpush.msra.mxu0 0.0
        %182 = vmatpush.msra.mxu0 0.0
        %183 = vmatpush.msra.mxu0 0.0
        %184 = vmatpush.msra.mxu0 0.0
        %185 = vmatpush.msra.mxu0 0.0
        %186 = vmatpush.msra.mxu0 0.0
        %187 = vmatpush.msra.mxu0 0.0
        %188 = vmatpush.msra.mxu0 0.0
        %189 = vmatpush.msra.mxu0 0.0
        %190 = vmatpush.msra.mxu0 0.0
        %191 = vmatpush.msra.mxu0 %v123
        %192 = vmatmul.f32.gmra.mxu0 %v171
        %v193 = vpop.f32.mrf.mxu0
        %v194 = vadd.f32 0.0, %v193
        %195 = vmatmul.f32.gmra.mxu0 %v174
        %v196 = vpop.f32.mrf.mxu0
        %v197 = vadd.f32 0.0, %v196
        %198 = vdwg.mxu0
        %199 = vxpose.xlu0.b32.start [1/16] %v134, 128
        %200 = vxpose.xlu0.b32.cont [2/16] 0.0, 128
        %201 = vxpose.xlu0.b32.cont [3/16] 0.0, 128
        %202 = vxpose.xlu0.b32.cont [4/16] 0.0, 128
        %203 = vxpose.xlu0.b32.cont [5/16] 0.0, 128
        %204 = vxpose.xlu0.b32.cont [6/16] 0.0, 128
        %205 = vxpose.xlu0.b32.cont [7/16] 0.0, 128
        %206 = vxpose.xlu0.b32.cont [8/16] 0.0, 128
        %207 = vxpose.xlu0.b32.cont [9/16] 0.0, 128
        %208 = vxpose.xlu0.b32.cont [10/16] 0.0, 128
        %209 = vxpose.xlu0.b32.cont [11/16] 0.0, 128
        %210 = vxpose.xlu0.b32.cont [12/16] 0.0, 128
        %211 = vxpose.xlu0.b32.cont [13/16] 0.0, 128
        %212 = vxpose.xlu0.b32.cont [14/16] 0.0, 128
        %213 = vxpose.xlu0.b32.cont [15/16] 0.0, 128
        %214 = vxpose.xlu0.b32.end [16/16] 0.0, 128
        %v215 = vpop.trf.xlu0
        %v216 = vpop.trf.xlu0
        %v217 = vpop.trf.xlu0
        %v218 = vpop.trf.xlu0
        %v219 = vpop.trf.xlu0
        %v220 = vpop.trf.xlu0
        %v221 = vpop.trf.xlu0
        %v222 = vpop.trf.xlu0
        %v223 = vpop.trf.xlu0
        %v224 = vpop.trf.xlu0
        %v225 = vpop.trf.xlu0
        %v226 = vpop.trf.xlu0
        %v227 = vpop.trf.xlu0
        %v228 = vpop.trf.xlu0
        %v229 = vpop.trf.xlu0
        %v230 = vpop.trf.xlu0
        %v232 = vsel %vm169, %v215, 0
        %v235 = vsel %vm169, %v216, 0
        %237 = vmatpush.msra.mxu0 0.0
        %238 = vmatpush.msra.mxu0 0.0
        %239 = vmatpush.msra.mxu0 0.0
        %240 = vmatpush.msra.mxu0 0.0
        %241 = vmatpush.msra.mxu0 0.0
        %242 = vmatpush.msra.mxu0 0.0
        %243 = vmatpush.msra.mxu0 0.0
        %244 = vmatpush.msra.mxu0 0.0
        %245 = vmatpush.msra.mxu0 0.0
        %246 = vmatpush.msra.mxu0 0.0
        %247 = vmatpush.msra.mxu0 0.0
        %248 = vmatpush.msra.mxu0 0.0
        %249 = vmatpush.msra.mxu0 0.0
        %250 = vmatpush.msra.mxu0 0.0
        %251 = vmatpush.msra.mxu0 0.0
        %252 = vmatpush.msra.mxu0 %v124
        %253 = vmatmul.f32.gmra.mxu0 %v232
        %v254 = vpop.f32.mrf.mxu0
        %v255 = vadd.f32 0.0, %v254
        %256 = vmatmul.f32.gmra.mxu0 %v235
        %v257 = vpop.f32.mrf.mxu0
        %v258 = vadd.f32 0.0, %v257
        %259 = vdwg.mxu0
        %v260 = vld [vmem:[#allocation3] sm:$0x1]
        %v261 = vld [vmem:[#allocation3 + $0x1] sm:$0x1]
        %v262 = vsel %vm130, %v194, -inf
        %v263 = vsel %vm130, %v197, -inf
        %v264 = vmax.f32 %v262, %v263
        %v265 = vrot.slane %v264, 4
        %v266 = vmax.f32 %v264, %v265
        %v267 = vrot.slane %v266, 2
        %v268 = vmax.f32 %v266, %v267
        %v269 = vrot.slane %v268, 1
        %v270 = vmax.f32 %v268, %v269
        %v271 = vsel %vm130, %v255, -inf
        %v272 = vsel %vm130, %v258, -inf
        %v273 = vmax.f32 %v271, %v272
        %v274 = vrot.slane %v273, 4
        %v275 = vmax.f32 %v273, %v274
        %v276 = vrot.slane %v275, 2
        %v277 = vmax.f32 %v275, %v276
        %v278 = vrot.slane %v277, 1
        %v279 = vmax.f32 %v277, %v278
        %v280 = vmax.f32 %v260, %v270
        %v281 = vmax.f32 %v261, %v279
        %v282 = vsub.f32 %v260, %v280
        %v283 = vsub.f32 %v261, %v281
        %v284 = vmul.f32 %v282, 1.442695
        %v285 = vpow.pop %v284
        %v286 = vmul.f32 %v283, 1.442695
        %v287 = vpow.pop %v286
        %v290 = vperm.slane %v280, 0
        %v291 = vperm.slane %v281, 0
        %v294 = vsub.f32 %v194, %v290
        %v295 = vsub.f32 %v197, %v290
        %v296 = vsub.f32 %v255, %v291
        %v297 = vsub.f32 %v258, %v291
        %v298 = vmul.f32 %v294, 1.442695
        %v299 = vpow.pop %v298
        %v300 = vmul.f32 %v295, 1.442695
        %v301 = vpow.pop %v300
        %v302 = vmul.f32 %v296, 1.442695
        %v303 = vpow.pop %v302
        %v304 = vmul.f32 %v297, 1.442695
        %v305 = vpow.pop %v304
        %v306 = vld [vmem:[#allocation4] sm:$0x1]
        %v307 = vld [vmem:[#allocation4 + $0x1] sm:$0x1]
        %v308 = vmul.f32 %v285, %v306
        %v309 = vmul.f32 %v287, %v307
        %v310 = vsel %vm130, %v299, 0.0
        %v311 = vsel %vm130, %v301, 0.0
        %v312 = vadd.f32 %v310, %v311
        %v313 = vrot.slane %v312, 4
        %v314 = vadd.f32 %v312, %v313
        %v315 = vrot.slane %v314, 2
        %v316 = vadd.f32 %v314, %v315
        %v317 = vrot.slane %v316, 1
        %v318 = vadd.f32 %v316, %v317
        %v319 = vsel %vm130, %v303, 0.0
        %v320 = vsel %vm130, %v305, 0.0
        %v321 = vadd.f32 %v319, %v320
        %v322 = vrot.slane %v321, 4
        %v323 = vadd.f32 %v321, %v322
        %v324 = vrot.slane %v323, 2
        %v325 = vadd.f32 %v323, %v324
        %v326 = vrot.slane %v325, 1
        %v327 = vadd.f32 %v325, %v326
        %v328 = vadd.f32 %v308, %v318
        %v329 = vadd.f32 %v309, %v327
        %330 = vst.msk [vmem:[#allocation4] sm:$0x1] %vm125, %v328
        %331 = vst.msk [vmem:[#allocation4 + $0x1] sm:$0x1] %vm125, %v329
        %v332 = vld [vmem:[#allocation2] sm:$0xff]
        %v333 = vld [vmem:[#allocation2 + $0x8] sm:$0xff]
        %v336 = vperm.slane %v285, 0
        %v337 = vperm.slane %v287, 0
        %v340 = vmul.f32 %v336, %v332
        %v341 = vmul.f32 %v337, %v333
        %v343 = vsel %vm130, %v135, 0
        %345 = vmatpush.msra.mxu0 0.0
        %346 = vmatpush.msra.mxu0 0.0
        %347 = vmatpush.msra.mxu0 0.0
        %348 = vmatpush.msra.mxu0 0.0
        %349 = vmatpush.msra.mxu0 0.0
        %350 = vmatpush.msra.mxu0 0.0
        %351 = vmatpush.msra.mxu0 0.0
        %352 = vmatpush.msra.mxu0 0.0
        %353 = vmatpush.msra.mxu0 0.0
        %354 = vmatpush.msra.mxu0 0.0
        %355 = vmatpush.msra.mxu0 0.0
        %356 = vmatpush.msra.mxu0 0.0
        %357 = vmatpush.msra.mxu0 0.0
        %358 = vmatpush.msra.mxu0 0.0
        %359 = vmatpush.msra.mxu0 %v301
        %360 = vmatpush.msra.mxu0 %v299
        %361 = vmatmul.f32.gmra.mxu0 %v343
        %v362 = vpop.f32.mrf.mxu0
        %v363 = vadd.f32 0.0, %v362
        %364 = vdwg.mxu0
        %v366 = vsel %vm130, %v136, 0
        %368 = vmatpush.msra.mxu0 0.0
        %369 = vmatpush.msra.mxu0 0.0
        %370 = vmatpush.msra.mxu0 0.0
        %371 = vmatpush.msra.mxu0 0.0
        %372 = vmatpush.msra.mxu0 0.0
        %373 = vmatpush.msra.mxu0 0.0
        %374 = vmatpush.msra.mxu0 0.0
        %375 = vmatpush.msra.mxu0 0.0
        %376 = vmatpush.msra.mxu0 0.0
        %377 = vmatpush.msra.mxu0 0.0
        %378 = vmatpush.msra.mxu0 0.0
        %379 = vmatpush.msra.mxu0 0.0
        %380 = vmatpush.msra.mxu0 0.0
        %381 = vmatpush.msra.mxu0 0.0
        %382 = vmatpush.msra.mxu0 %v305
        %383 = vmatpush.msra.mxu0 %v303
        %384 = vmatmul.f32.gmra.mxu0 %v366
        %v385 = vpop.f32.mrf.mxu0
        %v386 = vadd.f32 0.0, %v385
        %387 = vdwg.mxu0
        %v388 = vadd.f32 %v340, %v363
        %v389 = vadd.f32 %v341, %v386
        %390 = vst.msk [vmem:[#allocation2] sm:$0xff] %vm130, %v388
        %391 = vst.msk [vmem:[#allocation2 + $0x8] sm:$0xff] %vm130, %v389
        %392 = vst.msk [vmem:[#allocation3] sm:$0x1] %vm125, %v280
        %393 = vst.msk [vmem:[#allocation3 + $0x1] sm:$0x1] %vm125, %v281
        %v394 = vld [vmem:[#allocation4] sm:$0x1]
        %v395 = vld [vmem:[#allocation4 + $0x1] sm:$0x1]
        %v396 = vrcp.pop %v394
        %v397 = vrcp.pop %v395
        %v398 = vld [vmem:[#allocation2] sm:$0xff]
        %v399 = vld [vmem:[#allocation2 + $0x8] sm:$0xff]
        %v402 = vperm.slane %v396, 0
        %v403 = vperm.slane %v397, 0
        %v406 = vmul.f32 %v398, %v402
        %v407 = vmul.f32 %v399, %v403
        %408 = vst.msk [vmem:[%s112] sm:$0xff] %vm130, %v406
        %409 = vst.msk [vmem:[%s112 + $0x8] sm:$0xff] %vm130, %v407
        %s410 = sand.u32 %s49, 1
        %s411 = scalar_lea.sflag [#allocation6], %s410
        %s412 = sand.u32 %s49, 1
        %s413 = smul.addr %s412, 16
        %s414 = scalar_lea.vmem [#allocation5], %s413
        // Predicated region
        $region25: #{tpu_custom_call.1} parent=23 // pred_check
          %p415 = pneg %p59
        $region26: #{tpu_custom_call.1} parent=23 // pred_check_branch
          %417 = sbr.rel (%p415) target = $region28
        $region27: #{tpu_custom_call.1} parent=23 // pred_region
          %s418 = smul.u32 2, %s15
          %420 = vsyncadd %s411, 0
          %s421 = smul.addr %s418, 8
          %s422 = scalar_lea.hbm %s1, %s421
          %s423 = sshll.u32 %s414, 4
          %s424 = int_to_ptr.vmem [resolvable:$true] %s423
          %s425 = sshll.u32 %s422, 4
          %s426 = int_to_ptr.hbm [resolvable:$true] %s425
          %431 = dma.vmem_to_hbm [thread:$0]  %s424, 256, %s426, %s411, 128, 128, 8
        $region28: #{tpu_custom_call.1} parent=23 // pred_fallthru
          _
      $region24: #{tpu_custom_call.1} parent=5 // pred_fallthru
        _
      %p432 = scmp.le.s32.totalorder 2, %s10
      // Predicated region
      $region29: #{tpu_custom_call.1} parent=5 // pred_check
        %p433 = pneg %p432
      $region30: #{tpu_custom_call.1} parent=5 // pred_check_branch
        %435 = sbr.rel (%p433) target = $region32
      $region31: #{tpu_custom_call.1} parent=5 // pred_region
        %s436 = ssub.s32 %s10, 2
        // Predicated region
        $region33: #{tpu_custom_call.1} parent=31 // pred_check
          %p437 = pneg %p65
        $region34: #{tpu_custom_call.1} parent=31 // pred_check_branch
          %439 = sbr.rel (%p437) target = $region36
        $region35: #{tpu_custom_call.1} parent=31 // pred_region
          %s440 = sand.u32 %s50, 1
          %s441 = scalar_lea.sflag [#allocation6], %s440
          %s442 = sand.u32 %s50, 1
          %s443 = smul.addr %s442, 16
          %s444 = scalar_lea.vmem [#allocation5], %s443
          %446 = dma.done %s441, 256
        $region36: #{tpu_custom_call.1} parent=31 // pred_fallthru
          _
      $region32: #{tpu_custom_call.1} parent=5 // pred_fallthru
        _
    $region6: #{tpu_custom_call.1} parent=1 // loop_footer
      %s14 = sadd.s32 1, %s10
    $region7: #{tpu_custom_call.1} parent=1 // loop_footer_branch
      %9 = sbr.rel target = $region3
    $region8: #{tpu_custom_call.1} parent=1 // loop_exit
      _
    %447 = vsyncpa [#allocation6], 1
    %s448 = scalar_lea.sflag [#allocation6], 1
    %449 = vsyncpa %s448, 1

</llo_original>
